<compile_context>
chip_gen: v7x
topology: tpu7x:2x2x1
jax: 0.10.0
libtpu: 0.0.40
codegen_flags: <defaults>
</compile_context>

<pallas_src>
import math

import jax
import jax.numpy as jnp
from jax.experimental import pallas as pl
from jax.experimental.pallas import tpu as pltpu

STATE_DIM = 7
TACTILE_DIM = 24
ACTION_DIM = 4
HIDDEN_DIM = 128

_IN_PAD = 32                 # state (31 cols) zero-padded to 32 columns
_P = 128                     # lane-panel width inside the packed slabs
# Panel column offsets inside the (128, 768) weight slab / (1, 768) bias slab:
#   enc1 | policy-L1(state half) | enc2 | policy-L1(tactile half) | policy-L2 | policy-L3
_ENC1, _P1S, _ENC2, _P1T, _P2, _P3 = 0, 128, 256, 384, 512, 640
_SLAB_COLS = 6 * _P


def _round_up(x, m):
    return (x + m - 1) // m * m


def tactile_policy_kernel(x_ref, w_ref, b_ref, out_ref):
    """One batch tile of the full TactilePolicy forward pass.

    x_ref  : [TB, 32]   f32  (cols 0:7 basic state, 7:31 tactile, 31 zero pad)
    w_ref  : [128, 768] bf16 packed weights (6 lane-aligned 128-wide panels)
    b_ref  : [1, 768]   f32  packed biases  (same panel layout, zero padded)
    out_ref: [TB, 4]    f32
    """
    xb = x_ref[...].astype(jnp.bfloat16)

    # Fused first dot: tactile-encoder L1 and the basic-state half of policy L1
    # share the same LHS (padded state), so one 32x256 weight tile covers both.
    y0 = jnp.dot(xb, w_ref[0:32, _ENC1:_ENC1 + 2 * _P],
                 preferred_element_type=jnp.float32)                  # [TB, 256]
    h = jnp.maximum(y0[:, 0:_P] + b_ref[:, _ENC1:_ENC1 + _P], 0.0)    # cols 32: stay 0
    z1_state = y0[:, _P:2 * _P] + b_ref[:, _P1S:_P1S + _P]            # includes p_b1

    # Tactile encoder L2 (widths zero-padded to 128 lanes; padding stays 0).
    f = jnp.dot(h.astype(jnp.bfloat16), w_ref[:, _ENC2:_ENC2 + _P],
                preferred_element_type=jnp.float32)
    f = jnp.maximum(f + b_ref[:, _ENC2:_ENC2 + _P], 0.0)              # cols 16: stay 0

    # Policy L1, tactile half; sum == ReLU(concat([basic, feat]) @ W1 + b1).
    z1_tac = jnp.dot(f.astype(jnp.bfloat16), w_ref[:, _P1T:_P1T + _P],
                     preferred_element_type=jnp.float32)
    h1 = jnp.maximum(z1_state + z1_tac, 0.0)

    # Policy L2.
    h2 = jnp.dot(h1.astype(jnp.bfloat16), w_ref[:, _P2:_P2 + _P],
                 preferred_element_type=jnp.float32)
    h2 = jnp.maximum(h2 + b_ref[:, _P2:_P2 + _P], 0.0)

    # Policy L3 + tanh (panel is 128 wide, cols 4: are zero -> tanh(0)=0; slice last).
    o = jnp.dot(h2.astype(jnp.bfloat16), w_ref[:, _P3:_P3 + _P],
                preferred_element_type=jnp.float32)
    o = jnp.tanh(o + b_ref[:, _P3:_P3 + _P])
    out_ref[...] = o[:, 0:ACTION_DIM]


def tactile_policy_forward(state, packed, *, tb_max=512):
    """state: [B, 31] f32.  packed: (w_slab bf16 [128,768], b_slab f32 [1,768])."""
    w_slab, b_slab = packed
    B = state.shape[0]
    tb = min(tb_max, _round_up(B, 8))
    bp = _round_up(B, tb)
    # Pad batch to a tile multiple and add one zero column (31 -> 32).
    x = jnp.pad(state.astype(jnp.float32),
                ((0, bp - B), (0, _IN_PAD - state.shape[1])))

    out = pl.pallas_call(
        tactile_policy_kernel,
        out_shape=jax.ShapeDtypeStruct((bp, ACTION_DIM), jnp.float32),
        grid=(bp // tb,),
        in_specs=[
            pl.BlockSpec((tb, _IN_PAD), lambda i: (i, 0)),
            pl.BlockSpec((HIDDEN_DIM, _SLAB_COLS), lambda i: (0, 0)),  # resident weights
            pl.BlockSpec((1, _SLAB_COLS), lambda i: (0, 0)),           # resident biases
        ],
        out_specs=pl.BlockSpec((tb, ACTION_DIM), lambda i: (i, 0)),
        compiler_params=pltpu.CompilerParams(dimension_semantics=("parallel",)),
    )(x, w_slab, b_slab)
    return out[:B]


def _linear_init(key, fan_in, fan_out):
    """PyTorch nn.Linear default init: U(-1/sqrt(fan_in), 1/sqrt(fan_in))."""
    kw, kb = jax.random.split(key)
    bound = 1.0 / math.sqrt(fan_in)
    w = jax.random.uniform(kw, (fan_in, fan_out), jnp.float32, -bound, bound)
    b = jax.random.uniform(kb, (1, fan_out), jnp.float32, -bound, bound)
    return w, b


def init_params(key):
    keys = jax.random.split(key, 5)
    te_w1, te_b1 = _linear_init(keys[0], TACTILE_DIM, 32)
    te_w2, te_b2 = _linear_init(keys[1], 32, 16)
    p_w1, p_b1 = _linear_init(keys[2], STATE_DIM + 16, HIDDEN_DIM)
    p_w2, p_b2 = _linear_init(keys[3], HIDDEN_DIM, HIDDEN_DIM)
    p_w3, p_b3 = _linear_init(keys[4], HIDDEN_DIM, ACTION_DIM)
    return {
        "te_w1": te_w1, "te_b1": te_b1,
        "te_w2": te_w2, "te_b2": te_b2,
        "p_w1_state": p_w1[:STATE_DIM, :],   # rows multiplying basic_state
        "p_w1_tac": p_w1[STATE_DIM:, :],     # rows multiplying tactile_features
        "p_b1": p_b1,
        "p_w2": p_w2, "p_b2": p_b2,
        "p_w3": p_w3, "p_b3": p_b3,
    }


def pack_params(params):
    """Pack all weights/biases into two lane-aligned, zero-padded slabs."""
    w = jnp.zeros((HIDDEN_DIM, _SLAB_COLS), jnp.float32)
    w = w.at[STATE_DIM:STATE_DIM + TACTILE_DIM, _ENC1:_ENC1 + 32].set(params["te_w1"])
    w = w.at[0:STATE_DIM, _P1S:_P1S + HIDDEN_DIM].set(params["p_w1_state"])
    w = w.at[0:32, _ENC2:_ENC2 + 16].set(params["te_w2"])
    w = w.at[0:16, _P1T:_P1T + HIDDEN_DIM].set(params["p_w1_tac"])
    w = w.at[:, _P2:_P2 + HIDDEN_DIM].set(params["p_w2"])
    w = w.at[:, _P3:_P3 + ACTION_DIM].set(params["p_w3"])

    b = jnp.zeros((1, _SLAB_COLS), jnp.float32)
    b = b.at[:, _ENC1:_ENC1 + 32].set(params["te_b1"])
    b = b.at[:, _P1S:_P1S + HIDDEN_DIM].set(params["p_b1"])   # policy-L1 bias added once
    b = b.at[:, _ENC2:_ENC2 + 16].set(params["te_b2"])
    b = b.at[:, _P2:_P2 + HIDDEN_DIM].set(params["p_b2"])
    b = b.at[:, _P3:_P3 + ACTION_DIM].set(params["p_b3"])
    return w.astype(jnp.bfloat16), b


def reference_forward(state, params):
    """Pure-JAX f32 reference mirroring the PyTorch module exactly."""
    basic = state[:, :STATE_DIM]
    tactile = state[:, STATE_DIM:]
    h = jax.nn.relu(tactile @ params["te_w1"] + params["te_b1"])
    feat = jax.nn.relu(h @ params["te_w2"] + params["te_b2"])
    combined = jnp.concatenate([basic, feat], axis=1)
    w1 = jnp.concatenate([params["p_w1_state"], params["p_w1_tac"]], axis=0)
    h1 = jax.nn.relu(combined @ w1 + params["p_b1"])
    h2 = jax.nn.relu(h1 @ params["p_w2"] + params["p_b2"])
    return jnp.tanh(h2 @ params["p_w3"] + params["p_b3"])


def reference_forward_bf16(state, params):
    """Pure-JAX reference that mimics the kernel's bf16 MXU operands / f32 accum."""
    bf = lambda a: a.astype(jnp.bfloat16)
    dot = lambda a, b: jnp.dot(bf(a), bf(b), preferred_element_type=jnp.float32)
    basic = state[:, :STATE_DIM]
    tactile = state[:, STATE_DIM:]
    h = jax.nn.relu(dot(tactile, params["te_w1"]) + params["te_b1"])
    feat = jax.nn.relu(dot(h, params["te_w2"]) + params["te_b2"])
    z1 = (dot(basic, params["p_w1_state"]) + dot(feat, params["p_w1_tac"])
          + params["p_b1"])
    h1 = jax.nn.relu(z1)
    h2 = jax.nn.relu(dot(h1, params["p_w2"]) + params["p_b2"])
    return jnp.tanh(dot(h2, params["p_w3"]) + params["p_b3"])


if __name__ == "__main__":
    key = jax.random.PRNGKey(0)
    k_params, k_state, k_state2 = jax.random.split(key, 3)

    params = init_params(k_params)
    packed = pack_params(params)

    # Small single-tile case (grid = 1).
    B = 8
    state = jax.random.normal(k_state, (B, STATE_DIM + TACTILE_DIM), jnp.float32)
    actions = jax.block_until_ready(tactile_policy_forward(state, packed))
    assert actions.shape == (B, ACTION_DIM)
    assert jnp.allclose(actions, reference_forward_bf16(state, params),
                        atol=5e-3, rtol=5e-3)
    assert jnp.allclose(actions, reference_forward(state, params),
                        atol=5e-2, rtol=5e-2)

    # Multi-tile grid case (exercises batch padding + resident weight slabs).
    B2 = 40
    state2 = jax.random.normal(k_state2, (B2, STATE_DIM + TACTILE_DIM), jnp.float32)
    actions2 = jax.block_until_ready(
        tactile_policy_forward(state2, packed, tb_max=16))
    assert actions2.shape == (B2, ACTION_DIM)
    assert jnp.allclose(actions2, reference_forward_bf16(state2, params),
                        atol=5e-3, rtol=5e-3)

    print("KERNEL_OK")
</pallas_src>

<mosaic_0001>
module attributes {stable_mosaic.version = 11 : i64} {
  func.func @tactile_policy_kernel(%arg0: i32, %arg1: memref<8x32xf32, #tpu.memory_space<vmem>>, %arg2: memref<128x768xbf16, #tpu.memory_space<vmem>>, %arg3: memref<1x768xf32, #tpu.memory_space<vmem>>, %arg4: memref<8x4xf32, #tpu.memory_space<vmem>>) attributes {dimension_semantics = [#tpu.dimension_semantics<parallel>], iteration_bounds = array<i64: 1>, scalar_prefetch = 0 : i64, scratch_operands = 0 : i64, tpu.core_type = #tpu.core_type<tc>, window_params = [{transform_indices = @transform_0, window_bounds = array<i64: 8, 32>}, {pipeline_mode = #tpu.pipeline_mode<synchronous>, transform_indices = @transform_1, window_bounds = array<i64: 128, 768>}, {pipeline_mode = #tpu.pipeline_mode<synchronous>, transform_indices = @transform_2, window_bounds = array<i64: 1, 768>}, {transform_indices = @transform_3, window_bounds = array<i64: 8, 4>}]} {
    %c0 = arith.constant 0 : index
    %c0_0 = arith.constant 0 : index
    %0 = vector.load %arg1[%c0, %c0_0] : memref<8x32xf32, #tpu.memory_space<vmem>>, vector<8x32xf32>
    %1 = arith.truncf %0 : vector<8x32xf32> to vector<8x32xbf16>
    %c0_1 = arith.constant 0 : index
    %c0_2 = arith.constant 0 : index
    %2 = vector.load %arg2[%c0_1, %c0_2] : memref<128x768xbf16, #tpu.memory_space<vmem>>, vector<32x256xbf16>
    %cst = arith.constant dense<0.000000e+00> : vector<8x256xf32>
    %3 = tpu.matmul %1, %2, %cst {dimension_numbers = #tpu.dot_dimension_numbers<[1], [0], [0], [1], [0, 0, 1, 1], [], []>} : vector<8x32xbf16>, vector<32x256xbf16>, vector<8x256xf32> -> vector<8x256xf32>
    %4 = vector.extract_strided_slice %3 {offsets = [0, 0], sizes = [8, 128], strides = [1, 1]} : vector<8x256xf32> to vector<8x128xf32>
    %c0_3 = arith.constant 0 : index
    %c0_4 = arith.constant 0 : index
    %5 = vector.load %arg3[%c0_3, %c0_4] : memref<1x768xf32, #tpu.memory_space<vmem>>, vector<1x128xf32>
    %6 = vector.broadcast %5 : vector<1x128xf32> to vector<8x128xf32>
    %7 = arith.addf %4, %6 : vector<8x128xf32>
    %cst_5 = arith.constant 0.000000e+00 : f32
    %8 = vector.broadcast %cst_5 : f32 to vector<8x128xf32>
    %9 = arith.maximumf %7, %8 : vector<8x128xf32>
    %10 = vector.extract_strided_slice %3 {offsets = [0, 128], sizes = [8, 128], strides = [1, 1]} : vector<8x256xf32> to vector<8x128xf32>
    %c0_6 = arith.constant 0 : index
    %c128 = arith.constant 128 : index
    %11 = vector.load %arg3[%c0_6, %c128] : memref<1x768xf32, #tpu.memory_space<vmem>>, vector<1x128xf32>
    %12 = vector.broadcast %11 : vector<1x128xf32> to vector<8x128xf32>
    %13 = arith.addf %10, %12 : vector<8x128xf32>
    %14 = arith.truncf %9 : vector<8x128xf32> to vector<8x128xbf16>
    %c0_7 = arith.constant 0 : index
    %c256 = arith.constant 256 : index
    %15 = vector.load %arg2[%c0_7, %c256] : memref<128x768xbf16, #tpu.memory_space<vmem>>, vector<128x128xbf16>
    %cst_8 = arith.constant dense<0.000000e+00> : vector<8x128xf32>
    %16 = tpu.matmul %14, %15, %cst_8 {dimension_numbers = #tpu.dot_dimension_numbers<[1], [0], [0], [1], [0, 0, 1, 1], [], []>} : vector<8x128xbf16>, vector<128x128xbf16>, vector<8x128xf32> -> vector<8x128xf32>
    %c0_9 = arith.constant 0 : index
    %c256_10 = arith.constant 256 : index
    %17 = vector.load %arg3[%c0_9, %c256_10] : memref<1x768xf32, #tpu.memory_space<vmem>>, vector<1x128xf32>
    %18 = vector.broadcast %17 : vector<1x128xf32> to vector<8x128xf32>
    %19 = arith.addf %16, %18 : vector<8x128xf32>
    %cst_11 = arith.constant 0.000000e+00 : f32
    %20 = vector.broadcast %cst_11 : f32 to vector<8x128xf32>
    %21 = arith.maximumf %19, %20 : vector<8x128xf32>
    %22 = arith.truncf %21 : vector<8x128xf32> to vector<8x128xbf16>
    %c0_12 = arith.constant 0 : index
    %c384 = arith.constant 384 : index
    %23 = vector.load %arg2[%c0_12, %c384] : memref<128x768xbf16, #tpu.memory_space<vmem>>, vector<128x128xbf16>
    %cst_13 = arith.constant dense<0.000000e+00> : vector<8x128xf32>
    %24 = tpu.matmul %22, %23, %cst_13 {dimension_numbers = #tpu.dot_dimension_numbers<[1], [0], [0], [1], [0, 0, 1, 1], [], []>} : vector<8x128xbf16>, vector<128x128xbf16>, vector<8x128xf32> -> vector<8x128xf32>
    %25 = arith.addf %13, %24 : vector<8x128xf32>
    %cst_14 = arith.constant 0.000000e+00 : f32
    %26 = vector.broadcast %cst_14 : f32 to vector<8x128xf32>
    %27 = arith.maximumf %25, %26 : vector<8x128xf32>
    %28 = arith.truncf %27 : vector<8x128xf32> to vector<8x128xbf16>
    %c0_15 = arith.constant 0 : index
    %c512 = arith.constant 512 : index
    %29 = vector.load %arg2[%c0_15, %c512] : memref<128x768xbf16, #tpu.memory_space<vmem>>, vector<128x128xbf16>
    %cst_16 = arith.constant dense<0.000000e+00> : vector<8x128xf32>
    %30 = tpu.matmul %28, %29, %cst_16 {dimension_numbers = #tpu.dot_dimension_numbers<[1], [0], [0], [1], [0, 0, 1, 1], [], []>} : vector<8x128xbf16>, vector<128x128xbf16>, vector<8x128xf32> -> vector<8x128xf32>
    %c0_17 = arith.constant 0 : index
    %c512_18 = arith.constant 512 : index
    %31 = vector.load %arg3[%c0_17, %c512_18] : memref<1x768xf32, #tpu.memory_space<vmem>>, vector<1x128xf32>
    %32 = vector.broadcast %31 : vector<1x128xf32> to vector<8x128xf32>
    %33 = arith.addf %30, %32 : vector<8x128xf32>
    %cst_19 = arith.constant 0.000000e+00 : f32
    %34 = vector.broadcast %cst_19 : f32 to vector<8x128xf32>
    %35 = arith.maximumf %33, %34 : vector<8x128xf32>
    %36 = arith.truncf %35 : vector<8x128xf32> to vector<8x128xbf16>
    %c0_20 = arith.constant 0 : index
    %c640 = arith.constant 640 : index
    %37 = vector.load %arg2[%c0_20, %c640] : memref<128x768xbf16, #tpu.memory_space<vmem>>, vector<128x128xbf16>
    %cst_21 = arith.constant dense<0.000000e+00> : vector<8x128xf32>
    %38 = tpu.matmul %36, %37, %cst_21 {dimension_numbers = #tpu.dot_dimension_numbers<[1], [0], [0], [1], [0, 0, 1, 1], [], []>} : vector<8x128xbf16>, vector<128x128xbf16>, vector<8x128xf32> -> vector<8x128xf32>
    %c0_22 = arith.constant 0 : index
    %c640_23 = arith.constant 640 : index
    %39 = vector.load %arg3[%c0_22, %c640_23] : memref<1x768xf32, #tpu.memory_space<vmem>>, vector<1x128xf32>
    %40 = vector.broadcast %39 : vector<1x128xf32> to vector<8x128xf32>
    %41 = arith.addf %38, %40 : vector<8x128xf32>
    %42 = math.tanh %41 : vector<8x128xf32>
    %43 = vector.extract_strided_slice %42 {offsets = [0, 0], sizes = [8, 4], strides = [1, 1]} : vector<8x128xf32> to vector<8x4xf32>
    %c0_24 = arith.constant 0 : index
    %c0_25 = arith.constant 0 : index
    %44 = vector.load %arg4[%c0_24, %c0_25] : memref<8x4xf32, #tpu.memory_space<vmem>>, vector<8x4xf32>
    tpu.vector_store %arg4[%c0_24, %c0_25], %43 {strides = array<i32>} : memref<8x4xf32, #tpu.memory_space<vmem>>, vector<8x4xf32>,
    return
  }
  func.func @transform_0(%arg0: i32) -> (i32, i32) {
    %c0_i32 = arith.constant 0 : i32
    %c0_i32_0 = arith.constant 0 : i32
    return %arg0, %c0_i32 : i32, i32
  }
  func.func @transform_1(%arg0: i32) -> (i32, i32) {
    %c0_i32 = arith.constant 0 : i32
    %c0_i32_0 = arith.constant 0 : i32
    %c0_i32_1 = arith.constant 0 : i32
    return %c0_i32, %c0_i32_0 : i32, i32
  }
  func.func @transform_2(%arg0: i32) -> (i32, i32) {
    %c0_i32 = arith.constant 0 : i32
    %c0_i32_0 = arith.constant 0 : i32
    %c0_i32_1 = arith.constant 0 : i32
    return %c0_i32, %c0_i32_0 : i32, i32
  }
  func.func @transform_3(%arg0: i32) -> (i32, i32) {
    %c0_i32 = arith.constant 0 : i32
    %c0_i32_0 = arith.constant 0 : i32
    return %arg0, %c0_i32 : i32, i32
  }
}

</mosaic_0001>

<llo_original>
// kernel: tpu_custom_call.1
$region0: #{tpu_custom_call.1}
  #allocation0 [shape = 'u32[]', space=smem, size = 0x4, offset = 0x4, fixed_abs, tag = 'smem constant byte address 0x4 - core index']
  #allocation1 [shape = 'u32[144,128]{1,0:T(1,128)}', space=vmem, size = 0x12000, scoped, tag = 'internal scratch']
  %s0 = inlined_call_operand.hbm [shape: f32[8,32], index: 0, kind: input, shape index: {}]
  %s1 = inlined_call_operand.hbm [shape: bf16[128,768], index: 1, kind: input, shape index: {}]
  %s2 = inlined_call_operand.vmem [shape: f32[1,768], index: 2, kind: input, shape index: {}]
  %s3 = inlined_call_operand.vmem [shape: f32[8,4], index: 3, kind: output, shape index: {}]
  %s4 = sld [smem:[#allocation0]]
  $region30: #{tpu_custom_call.1} parent=0
    _
  %s6 = ssub.s32 1, %s4
  %s7 = scalar_select 0, %s6, %s4
  $region1: #{tpu_custom_call.1} parent=0
    #allocation2 [shape = 'u8[4096]{0}', space=vmem, size = 0x1000, scoped, tag = 'input window, operand 0, single buffered']
    #allocation3 [shape = 's32[1]{0}', space=sflag, size = 0x4, scoped, tag = 'scoped memory for tpu_custom_call.1']
    #allocation4 [shape = 'u8[196608]{0}', space=vmem, size = 0x30000, scoped, tag = 'input window, operand 1, single buffered']
    #allocation5 [shape = 's32[1]{0}', space=sflag, size = 0x4, scoped, tag = 'scoped memory for tpu_custom_call.1']
    %8 = vsyncpa [#allocation3], 0
    %9 = vsyncpa [#allocation5], 0
    // Predicated region
    $region2: #{tpu_custom_call.1} parent=1 // pred_check
      _
    $region3: #{tpu_custom_call.1} parent=1 // pred_check_branch
      %11 = sbr.rel (0) target = $region5
    $region4: #{tpu_custom_call.1} parent=1 // pred_region
      %s13 = ssub.s32 128, 128
      %14 = vsyncadd [#allocation3], %s13
      %s16 = sshll.u32 [#allocation2], 4
      %s17 = int_to_ptr.vmem [resolvable:$true] %s16
      %19 = dma.hbm_to_vmem [thread:$0]  %s0, 128, %s17, [#allocation3]
    $region5: #{tpu_custom_call.1} parent=1 // pred_fallthru
      _
    // Predicated region
    $region6: #{tpu_custom_call.1} parent=1 // pred_check
      _
    $region7: #{tpu_custom_call.1} parent=1 // pred_check_branch
      %21 = sbr.rel (0) target = $region9
    $region8: #{tpu_custom_call.1} parent=1 // pred_region
      %s23 = ssub.s32 6144, 6144
      %24 = vsyncadd [#allocation5], %s23
      %s25 = sshll.u32 [#allocation4], 4
      %s26 = int_to_ptr.vmem [resolvable:$true] %s25
      %31 = dma.hbm_to_vmem [thread:$0]  %s1, 6144, %s26, [#allocation5], 384, 384, 24
    $region9: #{tpu_custom_call.1} parent=1 // pred_fallthru
      _
    // Predicated region
    $region10: #{tpu_custom_call.1} parent=1 // pred_check
      _
    $region11: #{tpu_custom_call.1} parent=1 // pred_check_branch
      %33 = sbr.rel (0) target = $region13
    $region12: #{tpu_custom_call.1} parent=1 // pred_region
      _
    $region13: #{tpu_custom_call.1} parent=1 // pred_fallthru
      _
    // Predicated region
    $region14: #{tpu_custom_call.1} parent=1 // pred_check
      _
    $region15: #{tpu_custom_call.1} parent=1 // pred_check_branch
      %35 = sbr.rel (0) target = $region17
    $region16: #{tpu_custom_call.1} parent=1 // pred_region
      %36 = dma.done [#allocation3], 128
    $region17: #{tpu_custom_call.1} parent=1 // pred_fallthru
      _
    // Predicated region
    $region18: #{tpu_custom_call.1} parent=1 // pred_check
      _
    $region19: #{tpu_custom_call.1} parent=1 // pred_check_branch
      %38 = sbr.rel (0) target = $region21
    $region20: #{tpu_custom_call.1} parent=1 // pred_region
      %39 = dma.done [#allocation5], 6144
    $region21: #{tpu_custom_call.1} parent=1 // pred_fallthru
      _
    %v41 = vld [vmem:[#allocation2] sm:$0xff]
    %v42 = vpack.c.bf16 %v41, %v41
    %v43 = vld [vmem:[#allocation4] sm:$0xff]
    %v44 = vld [vmem:[#allocation4 + $0x18] sm:$0xff]
    %v45 = vld [vmem:[#allocation4 + $0x30] sm:$0xff]
    %v46 = vld [vmem:[#allocation4 + $0x48] sm:$0xff]
    %v51 = vunpack.c.l.b16 %v43
    %v52 = vunpack.c.h.b16 %v43
    %v53 = vunpack.c.l.b16 %v44
    %v54 = vunpack.c.h.b16 %v44
    %v55 = vunpack.c.l.b16 %v45
    %v56 = vunpack.c.h.b16 %v45
    %v57 = vunpack.c.l.b16 %v46
    %v58 = vunpack.c.h.b16 %v46
    %v59 = vpack.c.b16 %v53, %v51
    %v60 = vpack.c.b16 %v54, %v52
    %v61 = vpack.c.b16 %v57, %v55
    %v62 = vpack.c.b16 %v58, %v56
    %vm67 = vcmask 261120
    %v69 = vsel %vm67, %v42, 0
    %71 = vmatprep.subr.bf16.mxu0 %v60
    %72 = vmatpush1.bf16.msra.mxu0 %v59
    %73 = vmatprep.subr.bf16.mxu0 %v62
    %74 = vmatpush1.bf16.msra.mxu0 %v61
    %75 = vmatprep.subr.bf16.mxu0 0
    %76 = vmatpush1.bf16.msra.mxu0 0
    %77 = vmatprep.subr.bf16.mxu0 0
    %78 = vmatpush1.bf16.msra.mxu0 0
    %79 = vmatprep.subr.bf16.mxu0 0
    %80 = vmatpush1.bf16.msra.mxu0 0
    %81 = vmatprep.subr.bf16.mxu0 0
    %82 = vmatpush1.bf16.msra.mxu0 0
    %83 = vmatprep.subr.bf16.mxu0 0
    %84 = vmatpush1.bf16.msra.mxu0 0
    %85 = vmatprep.subr.bf16.mxu0 0
    %86 = vmatpush1.bf16.msra.mxu0 0
    %87 = vmatprep.subr.bf16.mxu0 0
    %88 = vmatpush1.bf16.msra.mxu0 0
    %89 = vmatprep.subr.bf16.mxu0 0
    %90 = vmatpush1.bf16.msra.mxu0 0
    %91 = vmatprep.subr.bf16.mxu0 0
    %92 = vmatpush1.bf16.msra.mxu0 0
    %93 = vmatprep.subr.bf16.mxu0 0
    %94 = vmatpush1.bf16.msra.mxu0 0
    %95 = vmatprep.subr.bf16.mxu0 0
    %96 = vmatpush1.bf16.msra.mxu0 0
    %97 = vmatprep.subr.bf16.mxu0 0
    %98 = vmatpush1.bf16.msra.mxu0 0
    %99 = vmatprep.subr.bf16.mxu0 0
    %100 = vmatpush1.bf16.msra.mxu0 0
    %101 = vmatprep.subr.bf16.mxu0 0
    %102 = vmatpush1.bf16.msra.mxu0 0
    %103 = vmatprep.mubr.bf16.mxu0 0
    %104 = vmatmul.mubr.bf16.gmra.mrb[0].mxu0 %v69
    %v105 = vpop.f32.mrb[0].mxu0
    %v106 = vadd.f32 0.0, %v105
    %v107 = vpop.f32.mrb[0].mxu0
    %v108 = vadd.f32 0.0, %v107
    %v109 = vpop.f32.mrb[0].mxu0
    %v110 = vpop.f32.mrb[0].mxu0
    %111 = vdwg.mxu0
    %v112 = vld [vmem:[%s2] sm:$0x1]
    %v114 = vlaneseq
    %v115 = vshrl.u32 %v114, 7
    %v116 = vsub.s32 0, %v115
    %v117 = vrot.slane %v112, %v116
    %v119 = vadd.f32 %v106, %v117
    %v120 = vmax.f32 %v119, 0.0
    %v121 = vld [vmem:[%s2 + $0x1] sm:$0x1]
    %v123 = vlaneseq
    %v124 = vshrl.u32 %v123, 7
    %v125 = vsub.s32 0, %v124
    %v126 = vrot.slane %v121, %v125
    %v128 = vadd.f32 %v108, %v126
    %v129 = vpack.c.bf16 %v120, %v120
    %v130 = vld [vmem:[#allocation4 + $0x8] sm:$0xf]
    %v131 = vld [vmem:[#allocation4 + $0x20] sm:$0xf]
    %v132 = vld [vmem:[#allocation4 + $0x38] sm:$0xf]
    %v133 = vld [vmem:[#allocation4 + $0x50] sm:$0xf]
    %v134 = vld [vmem:[#allocation4 + $0x68] sm:$0xf]
    %v135 = vld [vmem:[#allocation4 + $0x80] sm:$0xf]
    %v136 = vld [vmem:[#allocation4 + $0x98] sm:$0xf]
    %v137 = vld [vmem:[#allocation4 + $0xb0] sm:$0xf]
    %v138 = vld [vmem:[#allocation4 + $0xc8] sm:$0xf]
    %v139 = vld [vmem:[#allocation4 + $0xe0] sm:$0xf]
    %v140 = vld [vmem:[#allocation4 + $0xf8] sm:$0xf]
    %v141 = vld [vmem:[#allocation4 + $0x110] sm:$0xf]
    %v142 = vld [vmem:[#allocation4 + $0x128] sm:$0xf]
    %v143 = vld [vmem:[#allocation4 + $0x140] sm:$0xf]
    %v144 = vld [vmem:[#allocation4 + $0x158] sm:$0xf]
    %v145 = vld [vmem:[#allocation4 + $0x170] sm:$0xf]
    %v146 = vld [vmem:[%s2 + $0x2] sm:$0x1]
    %v148 = vlaneseq
    %v149 = vshrl.u32 %v148, 7
    %v150 = vsub.s32 0, %v149
    %v151 = vrot.slane %v146, %v150
    %v169 = vunpack.c.l.b16 %v130
    %v170 = vunpack.c.l.b16 %v131
    %v171 = vunpack.c.l.b16 %v132
    %v172 = vunpack.c.l.b16 %v133
    %v173 = vunpack.c.l.b16 %v134
    %v174 = vunpack.c.l.b16 %v135
    %v175 = vunpack.c.l.b16 %v136
    %v176 = vunpack.c.l.b16 %v137
    %v177 = vunpack.c.l.b16 %v138
    %v178 = vunpack.c.l.b16 %v139
    %v179 = vunpack.c.l.b16 %v140
    %v180 = vunpack.c.l.b16 %v141
    %v181 = vunpack.c.l.b16 %v142
    %v182 = vunpack.c.l.b16 %v143
    %v183 = vunpack.c.l.b16 %v144
    %v184 = vunpack.c.l.b16 %v145
    %v185 = vpack.c.b16 %v170, %v169
    %v186 = vpack.c.b16 %v172, %v171
    %v187 = vpack.c.b16 %v174, %v173
    %v188 = vpack.c.b16 %v176, %v175
    %v189 = vpack.c.b16 %v178, %v177
    %v190 = vpack.c.b16 %v180, %v179
    %v191 = vpack.c.b16 %v182, %v181
    %v192 = vpack.c.b16 %v184, %v183
    %201 = vmatprep.subr.bf16.mxu0 0
    %202 = vmatpush1.bf16.msra.mxu0 %v185
    %203 = vmatprep.subr.bf16.mxu0 0
    %204 = vmatpush1.bf16.msra.mxu0 %v186
    %205 = vmatprep.subr.bf16.mxu0 0
    %206 = vmatpush1.bf16.msra.mxu0 %v187
    %207 = vmatprep.subr.bf16.mxu0 0
    %208 = vmatpush1.bf16.msra.mxu0 %v188
    %209 = vmatprep.subr.bf16.mxu0 0
    %210 = vmatpush1.bf16.msra.mxu0 %v189
    %211 = vmatprep.subr.bf16.mxu0 0
    %212 = vmatpush1.bf16.msra.mxu0 %v190
    %213 = vmatprep.subr.bf16.mxu0 0
    %214 = vmatpush1.bf16.msra.mxu0 %v191
    %215 = vmatprep.subr.bf16.mxu0 0
    %216 = vmatpush1.bf16.msra.mxu0 %v192
    %217 = vmatprep.subr.bf16.mxu0 0
    %218 = vmatpush1.bf16.msra.mxu0 0
    %219 = vmatprep.subr.bf16.mxu0 0
    %220 = vmatpush1.bf16.msra.mxu0 0
    %221 = vmatprep.subr.bf16.mxu0 0
    %222 = vmatpush1.bf16.msra.mxu0 0
    %223 = vmatprep.subr.bf16.mxu0 0
    %224 = vmatpush1.bf16.msra.mxu0 0
    %225 = vmatprep.subr.bf16.mxu0 0
    %226 = vmatpush1.bf16.msra.mxu0 0
    %227 = vmatprep.subr.bf16.mxu0 0
    %228 = vmatpush1.bf16.msra.mxu0 0
    %229 = vmatprep.subr.bf16.mxu0 0
    %230 = vmatpush1.bf16.msra.mxu0 0
    %231 = vmatprep.subr.bf16.mxu0 0
    %232 = vmatpush1.bf16.msra.mxu0 0
    %233 = vmatprep.mubr.bf16.mxu0 0
    %234 = vmatmul.mubr.bf16.gmra.mrb[0].mxu0 %v129
    %v235 = vpop.f32.mrb[0].mxu0
    %v236 = vadd.f32 %v151, %v235
    %v237 = vpop.f32.mrb[0].mxu0
    %v238 = vpop.f32.mrb[0].mxu0
    %v239 = vpop.f32.mrb[0].mxu0
    %240 = vdwg.mxu0
    %v241 = vmax.f32 %v236, 0.0
    %v242 = vpack.c.bf16 %v241, %v241
    %v243 = vld [vmem:[#allocation4 + $0xc] sm:$0xf]
    %v244 = vld [vmem:[#allocation4 + $0x24] sm:$0xf]
    %v245 = vld [vmem:[#allocation4 + $0x3c] sm:$0xf]
    %v246 = vld [vmem:[#allocation4 + $0x54] sm:$0xf]
    %v247 = vld [vmem:[#allocation4 + $0x6c] sm:$0xf]
    %v248 = vld [vmem:[#allocation4 + $0x84] sm:$0xf]
    %v249 = vld [vmem:[#allocation4 + $0x9c] sm:$0xf]
    %v250 = vld [vmem:[#allocation4 + $0xb4] sm:$0xf]
    %v251 = vld [vmem:[#allocation4 + $0xcc] sm:$0xf]
    %v252 = vld [vmem:[#allocation4 + $0xe4] sm:$0xf]
    %v253 = vld [vmem:[#allocation4 + $0xfc] sm:$0xf]
    %v254 = vld [vmem:[#allocation4 + $0x114] sm:$0xf]
    %v255 = vld [vmem:[#allocation4 + $0x12c] sm:$0xf]
    %v256 = vld [vmem:[#allocation4 + $0x144] sm:$0xf]
    %v257 = vld [vmem:[#allocation4 + $0x15c] sm:$0xf]
    %v258 = vld [vmem:[#allocation4 + $0x174] sm:$0xf]
    %v275 = vunpack.c.l.b16 %v243
    %v276 = vunpack.c.l.b16 %v244
    %v277 = vunpack.c.l.b16 %v245
    %v278 = vunpack.c.l.b16 %v246
    %v279 = vunpack.c.l.b16 %v247
    %v280 = vunpack.c.l.b16 %v248
    %v281 = vunpack.c.l.b16 %v249
    %v282 = vunpack.c.l.b16 %v250
    %v283 = vunpack.c.l.b16 %v251
    %v284 = vunpack.c.l.b16 %v252
    %v285 = vunpack.c.l.b16 %v253
    %v286 = vunpack.c.l.b16 %v254
    %v287 = vunpack.c.l.b16 %v255
    %v288 = vunpack.c.l.b16 %v256
    %v289 = vunpack.c.l.b16 %v257
    %v290 = vunpack.c.l.b16 %v258
    %v291 = vpack.c.b16 %v276, %v275
    %v292 = vpack.c.b16 %v278, %v277
    %v293 = vpack.c.b16 %v280, %v279
    %v294 = vpack.c.b16 %v282, %v281
    %v295 = vpack.c.b16 %v284, %v283
    %v296 = vpack.c.b16 %v286, %v285
    %v297 = vpack.c.b16 %v288, %v287
    %v298 = vpack.c.b16 %v290, %v289
    %307 = vmatprep.subr.bf16.mxu0 0
    %308 = vmatpush1.bf16.msra.mxu0 %v291
    %309 = vmatprep.subr.bf16.mxu0 0
    %310 = vmatpush1.bf16.msra.mxu0 %v292
    %311 = vmatprep.subr.bf16.mxu0 0
    %312 = vmatpush1.bf16.msra.mxu0 %v293
    %313 = vmatprep.subr.bf16.mxu0 0
    %314 = vmatpush1.bf16.msra.mxu0 %v294
    %315 = vmatprep.subr.bf16.mxu0 0
    %316 = vmatpush1.bf16.msra.mxu0 %v295
    %317 = vmatprep.subr.bf16.mxu0 0
    %318 = vmatpush1.bf16.msra.mxu0 %v296
    %319 = vmatprep.subr.bf16.mxu0 0
    %320 = vmatpush1.bf16.msra.mxu0 %v297
    %321 = vmatprep.subr.bf16.mxu0 0
    %322 = vmatpush1.bf16.msra.mxu0 %v298
    %323 = vmatprep.subr.bf16.mxu0 0
    %324 = vmatpush1.bf16.msra.mxu0 0
    %325 = vmatprep.subr.bf16.mxu0 0
    %326 = vmatpush1.bf16.msra.mxu0 0
    %327 = vmatprep.subr.bf16.mxu0 0
    %328 = vmatpush1.bf16.msra.mxu0 0
    %329 = vmatprep.subr.bf16.mxu0 0
    %330 = vmatpush1.bf16.msra.mxu0 0
    %331 = vmatprep.subr.bf16.mxu0 0
    %332 = vmatpush1.bf16.msra.mxu0 0
    %333 = vmatprep.subr.bf16.mxu0 0
    %334 = vmatpush1.bf16.msra.mxu0 0
    %335 = vmatprep.subr.bf16.mxu0 0
    %336 = vmatpush1.bf16.msra.mxu0 0
    %337 = vmatprep.subr.bf16.mxu0 0
    %338 = vmatpush1.bf16.msra.mxu0 0
    %339 = vmatprep.mubr.bf16.mxu0 0
    %340 = vmatmul.mubr.bf16.gmra.mrb[0].mxu0 %v242
    %v341 = vpop.f32.mrb[0].mxu0
    %v342 = vadd.f32 0.0, %v341
    %v343 = vpop.f32.mrb[0].mxu0
    %v344 = vpop.f32.mrb[0].mxu0
    %v345 = vpop.f32.mrb[0].mxu0
    %346 = vdwg.mxu0
    %v347 = vadd.f32 %v128, %v342
    %v348 = vmax.f32 %v347, 0.0
    %v349 = vpack.c.bf16 %v348, %v348
    %v350 = vld [vmem:[#allocation4 + $0x10] sm:$0xf]
    %v351 = vld [vmem:[#allocation4 + $0x28] sm:$0xf]
    %v352 = vld [vmem:[#allocation4 + $0x40] sm:$0xf]
    %v353 = vld [vmem:[#allocation4 + $0x58] sm:$0xf]
    %v354 = vld [vmem:[#allocation4 + $0x70] sm:$0xf]
    %v355 = vld [vmem:[#allocation4 + $0x88] sm:$0xf]
    %v356 = vld [vmem:[#allocation4 + $0xa0] sm:$0xf]
    %v357 = vld [vmem:[#allocation4 + $0xb8] sm:$0xf]
    %v358 = vld [vmem:[#allocation4 + $0xd0] sm:$0xf]
    %v359 = vld [vmem:[#allocation4 + $0xe8] sm:$0xf]
    %v360 = vld [vmem:[#allocation4 + $0x100] sm:$0xf]
    %v361 = vld [vmem:[#allocation4 + $0x118] sm:$0xf]
    %v362 = vld [vmem:[#allocation4 + $0x130] sm:$0xf]
    %v363 = vld [vmem:[#allocation4 + $0x148] sm:$0xf]
    %v364 = vld [vmem:[#allocation4 + $0x160] sm:$0xf]
    %v365 = vld [vmem:[#allocation4 + $0x178] sm:$0xf]
    %v366 = vld [vmem:[%s2 + $0x4] sm:$0x1]
    %v368 = vlaneseq
    %v369 = vshrl.u32 %v368, 7
    %v370 = vsub.s32 0, %v369
    %v371 = vrot.slane %v366, %v370
    %v389 = vunpack.c.l.b16 %v350
    %v390 = vunpack.c.l.b16 %v351
    %v391 = vunpack.c.l.b16 %v352
    %v392 = vunpack.c.l.b16 %v353
    %v393 = vunpack.c.l.b16 %v354
    %v394 = vunpack.c.l.b16 %v355
    %v395 = vunpack.c.l.b16 %v356
    %v396 = vunpack.c.l.b16 %v357
    %v397 = vunpack.c.l.b16 %v358
    %v398 = vunpack.c.l.b16 %v359
    %v399 = vunpack.c.l.b16 %v360
    %v400 = vunpack.c.l.b16 %v361
    %v401 = vunpack.c.l.b16 %v362
    %v402 = vunpack.c.l.b16 %v363
    %v403 = vunpack.c.l.b16 %v364
    %v404 = vunpack.c.l.b16 %v365
    %v405 = vpack.c.b16 %v390, %v389
    %v406 = vpack.c.b16 %v392, %v391
    %v407 = vpack.c.b16 %v394, %v393
    %v408 = vpack.c.b16 %v396, %v395
    %v409 = vpack.c.b16 %v398, %v397
    %v410 = vpack.c.b16 %v400, %v399
    %v411 = vpack.c.b16 %v402, %v401
    %v412 = vpack.c.b16 %v404, %v403
    %421 = vmatprep.subr.bf16.mxu0 0
    %422 = vmatpush1.bf16.msra.mxu0 %v405
    %423 = vmatprep.subr.bf16.mxu0 0
    %424 = vmatpush1.bf16.msra.mxu0 %v406
    %425 = vmatprep.subr.bf16.mxu0 0
    %426 = vmatpush1.bf16.msra.mxu0 %v407
    %427 = vmatprep.subr.bf16.mxu0 0
    %428 = vmatpush1.bf16.msra.mxu0 %v408
    %429 = vmatprep.subr.bf16.mxu0 0
    %430 = vmatpush1.bf16.msra.mxu0 %v409
    %431 = vmatprep.subr.bf16.mxu0 0
    %432 = vmatpush1.bf16.msra.mxu0 %v410
    %433 = vmatprep.subr.bf16.mxu0 0
    %434 = vmatpush1.bf16.msra.mxu0 %v411
    %435 = vmatprep.subr.bf16.mxu0 0
    %436 = vmatpush1.bf16.msra.mxu0 %v412
    %437 = vmatprep.subr.bf16.mxu0 0
    %438 = vmatpush1.bf16.msra.mxu0 0
    %439 = vmatprep.subr.bf16.mxu0 0
    %440 = vmatpush1.bf16.msra.mxu0 0
    %441 = vmatprep.subr.bf16.mxu0 0
    %442 = vmatpush1.bf16.msra.mxu0 0
    %443 = vmatprep.subr.bf16.mxu0 0
    %444 = vmatpush1.bf16.msra.mxu0 0
    %445 = vmatprep.subr.bf16.mxu0 0
    %446 = vmatpush1.bf16.msra.mxu0 0
    %447 = vmatprep.subr.bf16.mxu0 0
    %448 = vmatpush1.bf16.msra.mxu0 0
    %449 = vmatprep.subr.bf16.mxu0 0
    %450 = vmatpush1.bf16.msra.mxu0 0
    %451 = vmatprep.subr.bf16.mxu0 0
    %452 = vmatpush1.bf16.msra.mxu0 0
    %453 = vmatprep.mubr.bf16.mxu0 0
    %454 = vmatmul.mubr.bf16.gmra.mrb[0].mxu0 %v349
    %v455 = vpop.f32.mrb[0].mxu0
    %v456 = vadd.f32 %v371, %v455
    %v457 = vpop.f32.mrb[0].mxu0
    %v458 = vpop.f32.mrb[0].mxu0
    %v459 = vpop.f32.mrb[0].mxu0
    %460 = vdwg.mxu0
    %v461 = vmax.f32 %v456, 0.0
    %v462 = vpack.c.bf16 %v461, %v461
    %v463 = vld [vmem:[#allocation4 + $0x14] sm:$0xf]
    %v464 = vld [vmem:[#allocation4 + $0x2c] sm:$0xf]
    %v465 = vld [vmem:[#allocation4 + $0x44] sm:$0xf]
    %v466 = vld [vmem:[#allocation4 + $0x5c] sm:$0xf]
    %v467 = vld [vmem:[#allocation4 + $0x74] sm:$0xf]
    %v468 = vld [vmem:[#allocation4 + $0x8c] sm:$0xf]
    %v469 = vld [vmem:[#allocation4 + $0xa4] sm:$0xf]
    %v470 = vld [vmem:[#allocation4 + $0xbc] sm:$0xf]
    %v471 = vld [vmem:[#allocation4 + $0xd4] sm:$0xf]
    %v472 = vld [vmem:[#allocation4 + $0xec] sm:$0xf]
    %v473 = vld [vmem:[#allocation4 + $0x104] sm:$0xf]
    %v474 = vld [vmem:[#allocation4 + $0x11c] sm:$0xf]
    %v475 = vld [vmem:[#allocation4 + $0x134] sm:$0xf]
    %v476 = vld [vmem:[#allocation4 + $0x14c] sm:$0xf]
    %v477 = vld [vmem:[#allocation4 + $0x164] sm:$0xf]
    %v478 = vld [vmem:[#allocation4 + $0x17c] sm:$0xf]
    %v479 = vld [vmem:[%s2 + $0x5] sm:$0x1]
    %v481 = vlaneseq
    %v482 = vshrl.u32 %v481, 7
    %v483 = vsub.s32 0, %v482
    %v484 = vrot.slane %v479, %v483
    %v502 = vunpack.c.l.b16 %v463
    %v503 = vunpack.c.l.b16 %v464
    %v504 = vunpack.c.l.b16 %v465
    %v505 = vunpack.c.l.b16 %v466
    %v506 = vunpack.c.l.b16 %v467
    %v507 = vunpack.c.l.b16 %v468
    %v508 = vunpack.c.l.b16 %v469
    %v509 = vunpack.c.l.b16 %v470
    %v510 = vunpack.c.l.b16 %v471
    %v511 = vunpack.c.l.b16 %v472
    %v512 = vunpack.c.l.b16 %v473
    %v513 = vunpack.c.l.b16 %v474
    %v514 = vunpack.c.l.b16 %v475
    %v515 = vunpack.c.l.b16 %v476
    %v516 = vunpack.c.l.b16 %v477
    %v517 = vunpack.c.l.b16 %v478
    %v518 = vpack.c.b16 %v503, %v502
    %v519 = vpack.c.b16 %v505, %v504
    %v520 = vpack.c.b16 %v507, %v506
    %v521 = vpack.c.b16 %v509, %v508
    %v522 = vpack.c.b16 %v511, %v510
    %v523 = vpack.c.b16 %v513, %v512
    %v524 = vpack.c.b16 %v515, %v514
    %v525 = vpack.c.b16 %v517, %v516
    %534 = vmatprep.subr.bf16.mxu0 0
    %535 = vmatpush1.bf16.msra.mxu0 %v518
    %536 = vmatprep.subr.bf16.mxu0 0
    %537 = vmatpush1.bf16.msra.mxu0 %v519
    %538 = vmatprep.subr.bf16.mxu0 0
    %539 = vmatpush1.bf16.msra.mxu0 %v520
    %540 = vmatprep.subr.bf16.mxu0 0
    %541 = vmatpush1.bf16.msra.mxu0 %v521
    %542 = vmatprep.subr.bf16.mxu0 0
    %543 = vmatpush1.bf16.msra.mxu0 %v522
    %544 = vmatprep.subr.bf16.mxu0 0
    %545 = vmatpush1.bf16.msra.mxu0 %v523
    %546 = vmatprep.subr.bf16.mxu0 0
    %547 = vmatpush1.bf16.msra.mxu0 %v524
    %548 = vmatprep.subr.bf16.mxu0 0
    %549 = vmatpush1.bf16.msra.mxu0 %v525
    %550 = vmatprep.subr.bf16.mxu0 0
    %551 = vmatpush1.bf16.msra.mxu0 0
    %552 = vmatprep.subr.bf16.mxu0 0
    %553 = vmatpush1.bf16.msra.mxu0 0
    %554 = vmatprep.subr.bf16.mxu0 0
    %555 = vmatpush1.bf16.msra.mxu0 0
    %556 = vmatprep.subr.bf16.mxu0 0
    %557 = vmatpush1.bf16.msra.mxu0 0
    %558 = vmatprep.subr.bf16.mxu0 0
    %559 = vmatpush1.bf16.msra.mxu0 0
    %560 = vmatprep.subr.bf16.mxu0 0
    %561 = vmatpush1.bf16.msra.mxu0 0
    %562 = vmatprep.subr.bf16.mxu0 0
    %563 = vmatpush1.bf16.msra.mxu0 0
    %564 = vmatprep.subr.bf16.mxu0 0
    %565 = vmatpush1.bf16.msra.mxu0 0
    %566 = vmatprep.mubr.bf16.mxu0 0
    %567 = vmatmul.mubr.bf16.gmra.mrb[0].mxu0 %v462
    %v568 = vpop.f32.mrb[0].mxu0
    %v569 = vadd.f32 %v484, %v568
    %v570 = vpop.f32.mrb[0].mxu0
    %v571 = vpop.f32.mrb[0].mxu0
    %v572 = vpop.f32.mrb[0].mxu0
    %573 = vdwg.mxu0
    %v574 = vtanh.pop %v569
    %vm575 = vcmask 31744
    %576 = vst.msk [vmem:[%s3] sm:$0xff] %vm575, %v574
    // Predicated region
    $region22: #{tpu_custom_call.1} parent=1 // pred_check
      _
    $region23: #{tpu_custom_call.1} parent=1 // pred_check_branch
      %578 = sbr.rel (0) target = $region25
    $region24: #{tpu_custom_call.1} parent=1 // pred_region
      _
    $region25: #{tpu_custom_call.1} parent=1 // pred_fallthru
      _
    // Predicated region
    $region26: #{tpu_custom_call.1} parent=1 // pred_check
      _
    $region27: #{tpu_custom_call.1} parent=1 // pred_check_branch
      %580 = sbr.rel (0) target = $region29
    $region28: #{tpu_custom_call.1} parent=1 // pred_region
      _
    $region29: #{tpu_custom_call.1} parent=1 // pred_fallthru
      _
    %581 = vsyncpa [#allocation3], 1
    %582 = vsyncpa [#allocation5], 1

</llo_original>
